<compile_context>
chip_gen: v5e
topology: v5e:2x2
jax: 0.10.0
libtpu: 0.0.40
codegen_flags: <defaults>
</compile_context>

<pallas_src>
import functools

import jax
import jax.numpy as jnp
from jax import lax
from jax.experimental import pallas as pl
from jax.experimental.pallas import tpu as pltpu


def _round_up(x, m):
    return ((x + m - 1) // m) * m


def _lstm_recurrence_kernel(gx_ref, whh_t_ref, h_out_ref, h_sc, c_sc, *,
                            chunk_len, hidden_dim):
    """LSTM recurrence over one (batch-tile, time-chunk) block.

    gx_ref:    (Tc, Bt, 4H)  precomputed x_t @ W_ih^T + (b_ih + b_hh)  (f32/bf16)
    whh_t_ref: (H, 4H)       recurrent weight, pre-transposed           (f32/bf16)
    h_out_ref: (Tc, Bt, H)   hidden states for this chunk               (f32/bf16)
    h_sc/c_sc: (Bt, H)       float32 carries, persist across time chunks

    Gate order matches torch.nn.LSTM: [i, f, g, o]; c = f*c + i*g; h = o*tanh(c).
    """
    H = hidden_dim

    # Fresh state only at the first time chunk of each batch tile; the scratch
    # carries across the inner "arbitrary" time-chunk grid axis.
    @pl.when(pl.program_id(1) == 0)
    def _():
        h_sc[...] = jnp.zeros_like(h_sc)
        c_sc[...] = jnp.zeros_like(c_sc)

    mm_dtype = whh_t_ref.dtype
    lane_aligned = (H % 128 == 0)

    def step(t, carry):
        # Only the recurrent matmul remains on the serial critical path.
        # Keep W_hh as a VMEM read (no value hoist): avoids per-step vreg
        # spill traffic when H*4H*itemsize exceeds the 256 KiB vreg file.
        gates = gx_ref[t].astype(jnp.float32) + jnp.dot(
            h_sc[...].astype(mm_dtype), whh_t_ref[...],
            preferred_element_type=jnp.float32)                # (Bt, 4H) f32

        if lane_aligned:
            # 128-lane-aligned slices are free vreg selections: sigmoid over
            # the contiguous [i|f] block and [o], tanh over [g] -> 4H EUP
            # lanes per step instead of 8H.
            sig_if = jax.nn.sigmoid(gates[:, 0:2 * H])
            i_g = sig_if[:, 0:H]
            f_g = sig_if[:, H:2 * H]
            g_g = jnp.tanh(gates[:, 2 * H:3 * H])
            o_g = jax.nn.sigmoid(gates[:, 3 * H:4 * H])
        else:
            # H < 128: quarter-width slices would be sub-vreg; one full-width
            # sigmoid + tanh pass is cheaper.
            sig = jax.nn.sigmoid(gates)
            th = jnp.tanh(gates)
            i_g = sig[:, 0:H]
            f_g = sig[:, H:2 * H]
            g_g = th[:, 2 * H:3 * H]
            o_g = sig[:, 3 * H:4 * H]

        c_new = f_g * c_sc[...] + i_g * g_g
        h_new = o_g * jnp.tanh(c_new)
        c_sc[...] = c_new
        h_sc[...] = h_new
        h_out_ref[t] = h_new.astype(h_out_ref.dtype)
        return carry

    # Small partial unroll: lets the scheduler overlap the next step's gx load
    # and gate slicing with the current step's matmul drain + VPU/EUP tail,
    # without blowing up code size / vreg pressure.
    unroll = chunk_len if chunk_len <= 8 else 4
    lax.fori_loop(0, chunk_len, step, 0, unroll=unroll)


def lstm_hidden_states(gx, w_hh_t, *, hidden_dim, out_dtype=jnp.float32,
                       time_chunk=None, vmem_budget_bytes=40 * 1024 * 1024):
    """gx (T, B, 4H), w_hh_t (H, 4H) -> hidden states (T, B, H) in out_dtype."""
    T, B, G = gx.shape
    H = hidden_dim
    assert G == 4 * H

    # ---- batch tiling: MXU-filling, sublane-aligned, zero-padded batch ------
    # bf16 output packs 16 rows/sublane pair -> 16-row alignment keeps h_out
    # stores unmasked; f32 needs 8.
    sub = 16 if jnp.dtype(out_dtype) == jnp.dtype(jnp.bfloat16) else 8
    b_aligned = _round_up(B, sub)
    # 256 rows fills the MXU on v6e/v7x (and is exactly 2 passes of v5e's
    # 128-wide arrays).  Whenever padded B > 256 this also yields >=2
    # "parallel" batch tiles so v7x's second TensorCore gets work; we do NOT
    # shrink below MXU-fill just to create more tiles (hurts v5e/v6e).
    block_b = min(256, b_aligned)
    B_pad = _round_up(B, block_b)
    nb = B_pad // block_b

    # ---- time chunking: bound VMEM so block_b can stay large ----------------
    # Per-tile cost: double-buffered gx stream + double-buffered h_out stream
    # + (double-buffered) W_hh + f32 h/c scratch.  Budget ~40 MiB so tiles fit
    # v7x's 64 MiB physical VMEM with headroom (v5e/v6e have 128 MiB).
    gx_item = jnp.dtype(gx.dtype).itemsize
    out_item = jnp.dtype(out_dtype).itemsize
    whh_item = jnp.dtype(w_hh_t.dtype).itemsize
    fixed = 2 * H * 4 * H * whh_item + 2 * block_b * H * 4
    per_t = 2 * block_b * (4 * H * gx_item + H * out_item)
    if time_chunk is None:
        tc = max(1, min(T, max(0, vmem_budget_bytes - fixed) // per_t))
    else:
        tc = max(1, min(T, int(time_chunk)))
    T_pad = _round_up(T, tc)
    nt = T_pad // tc

    # Zero-pad; padded rows / trailing time steps are sliced off after the
    # call (time padding is at the end, so it never feeds real outputs).
    if (T_pad, B_pad) != (T, B):
        gx = jnp.pad(gx, ((0, T_pad - T), (0, B_pad - B), (0, 0)))

    est_vmem = fixed + tc * per_t + (1 << 20)
    vmem_limit = int(min(112 * 1024 * 1024,
                         max(48 * 1024 * 1024, est_vmem * 5 // 4)))

    kernel = functools.partial(_lstm_recurrence_kernel,
                               chunk_len=tc, hidden_dim=H)

    grid_spec = pltpu.PrefetchScalarGridSpec(
        num_scalar_prefetch=0,
        grid=(nb, nt),                   # batch tiles outer, time chunks inner
        in_specs=[
            pl.BlockSpec((tc, block_b, 4 * H), lambda b, t: (t, b, 0)),  # gx
            pl.BlockSpec((H, 4 * H), lambda b, t: (0, 0)),               # W_hh^T
        ],
        out_specs=pl.BlockSpec((tc, block_b, H), lambda b, t: (t, b, 0)),
        scratch_shapes=[
            pltpu.VMEM((block_b, H), jnp.float32),   # h carry (f32 state)
            pltpu.VMEM((block_b, H), jnp.float32),   # c carry (f32 state)
        ],
    )

    hs = pl.pallas_call(
        kernel,
        out_shape=jax.ShapeDtypeStruct((T_pad, B_pad, H), out_dtype),
        grid_spec=grid_spec,
        compiler_params=pltpu.CompilerParams(
            # Batch tiles are independent (v7x megacore sharding); time chunks
            # carry h/c state and must run sequentially.
            dimension_semantics=("parallel", "arbitrary"),
            vmem_limit_bytes=vmem_limit,
        ),
    )(gx, w_hh_t)

    return hs[:T, :B]


def bias_detector_forward(embedded, params, *, compute_dtype=jnp.float32,
                          time_chunk=None):
    """embedded: (T, B, E) f32 BERT-style embeddings -> (T, B, 2) f32 logits.

    compute_dtype=jnp.bfloat16 (v6e/v7x): bf16 MXU operands AND bf16 gx / h_out
    streams (halves HBM<->VMEM bytes + VMEM footprint).  Accumulation, gate
    elementwise math and the h/c state stay f32, so on v5e (no bf16 VPU/EUP)
    bf16 only ever touches MXU operands / DMA streams, never elementwise math.
    """
    T, B, E = embedded.shape
    H = params["w_hh"].shape[1]

    # Dropout: eval-mode identity.

    # Hoisted input projection: one large MXU-friendly matmul over all T*B rows
    # with the (b_ih + b_hh) bias folded in (removes a matmul + bias add from
    # the serial per-step path).
    bias = (params["b_ih"] + params["b_hh"]).astype(jnp.float32)
    w_ih_t = params["w_ih"].T.astype(compute_dtype)                    # (E, 4H)
    gx = jnp.dot(embedded.reshape(T * B, E).astype(compute_dtype), w_ih_t,
                 preferred_element_type=jnp.float32) + bias            # f32 acc
    gx = gx.reshape(T, B, 4 * H).astype(compute_dtype)                 # stream dtype

    # Sequential recurrence: Pallas kernel (time loop inside the kernel).
    w_hh_t = params["w_hh"].T.astype(compute_dtype)                    # (H, 4H)
    hs = lstm_hidden_states(gx, w_hh_t, hidden_dim=H,
                            out_dtype=compute_dtype, time_chunk=time_chunk)

    # Final Linear(H, 2) applied once to the lane-dense hidden-state slab.
    w_fc_t = params["w_fc"].T.astype(compute_dtype)                    # (H, 2)
    logits = jnp.dot(hs.reshape(T * B, H).astype(compute_dtype), w_fc_t,
                     preferred_element_type=jnp.float32)
    logits = logits + params["b_fc"].astype(jnp.float32)
    return logits.reshape(T, B, 2)


def reference_forward(embedded, params):
    """Pure-JAX f32 reference (torch.nn.LSTM semantics, eval-mode dropout)."""
    T, B, E = embedded.shape
    H = params["w_hh"].shape[1]
    w_ih, w_hh = params["w_ih"], params["w_hh"]
    b = params["b_ih"] + params["b_hh"]

    def step(carry, x_t):
        h, c = carry
        gates = x_t @ w_ih.T + h @ w_hh.T + b
        i = jax.nn.sigmoid(gates[:, 0 * H:1 * H])
        f = jax.nn.sigmoid(gates[:, 1 * H:2 * H])
        g = jnp.tanh(gates[:, 2 * H:3 * H])
        o = jax.nn.sigmoid(gates[:, 3 * H:4 * H])
        c = f * c + i * g
        h = o * jnp.tanh(c)
        return (h, c), h

    init = (jnp.zeros((B, H), jnp.float32), jnp.zeros((B, H), jnp.float32))
    _, hs = jax.lax.scan(step, init, embedded)         # (T, B, H)
    return hs @ params["w_fc"].T + params["b_fc"]      # (T, B, 2)


if __name__ == "__main__":
    def make_params(key, E, H):
        ks = jax.random.split(key, 6)
        return {
            "w_ih": jax.random.normal(ks[0], (4 * H, E), jnp.float32) * 0.1,
            "w_hh": jax.random.normal(ks[1], (4 * H, H), jnp.float32) * 0.1,
            "b_ih": jax.random.normal(ks[2], (4 * H,), jnp.float32) * 0.1,
            "b_hh": jax.random.normal(ks[3], (4 * H,), jnp.float32) * 0.1,
            "w_fc": jax.random.normal(ks[4], (2, H), jnp.float32) * 0.1,
            "b_fc": jax.random.normal(ks[5], (2,), jnp.float32) * 0.1,
        }

    key = jax.random.PRNGKey(0)
    k_emb, k_tok, k_p1, k_p2 = jax.random.split(key, 4)

    # Small, deterministic configuration.
    T, B, E, VOCAB = 8, 4, 32, 50

    # Embedder: deterministic embedding table (stand-in for the injected BERT
    # embedder dependency).  Dropout is eval-mode identity.
    emb_table = jax.random.normal(k_emb, (VOCAB, E), jnp.float32) * 0.1
    token_ids = jax.random.randint(k_tok, (T, B), 0, VOCAB)
    embedded = emb_table[token_ids]                      # (T, B, E) glue

    # --- Config 1: H=32 (< 128 -> full-width nonlinearity path) --------------
    p32 = make_params(k_p1, E, 32)
    ref32 = reference_forward(embedded, p32)

    out = jax.block_until_ready(bias_detector_forward(embedded, p32))
    assert out.shape == (T, B, 2)
    assert jnp.allclose(out, ref32, atol=1e-4, rtol=1e-4), "f32 mismatch"

    # Forced small time chunks (nt=3, padded T): exercises the h/c carry across
    # the 'arbitrary' time-chunk grid axis and the trailing time padding.
    out_tc = jax.block_until_ready(
        bias_detector_forward(embedded, p32, time_chunk=3))
    assert jnp.allclose(out_tc, ref32, atol=1e-4, rtol=1e-4), "chunked mismatch"

    # bf16 gx / h_out / matmul-operand streams (f32 accumulation + f32 state).
    out_bf16 = jax.block_until_ready(
        bias_detector_forward(embedded, p32, compute_dtype=jnp.bfloat16))
    assert jnp.allclose(out_bf16, ref32, atol=3e-2, rtol=3e-2), "bf16 mismatch"

    # --- Config 2: H=128 (lane-aligned -> per-gate nonlinearity path) --------
    p128 = make_params(k_p2, E, 128)
    ref128 = reference_forward(embedded, p128)
    out128 = jax.block_until_ready(bias_detector_forward(embedded, p128))
    # Slightly looser than 1e-4: XLA's default f32 matmul precision on TPU and
    # the fused kernel path may order/round 128-term accumulations differently.
    assert jnp.allclose(out128, ref128, atol=5e-3, rtol=5e-3), "H=128 mismatch"

    print("KERNEL_OK")
</pallas_src>

<mosaic_0001>
module attributes {stable_mosaic.version = 11 : i64} {
  func.func @_lstm_recurrence_kernel(%arg0: i32, %arg1: i32, %arg2: memref<8x8x128xf32, #tpu.memory_space<vmem>>, %arg3: memref<32x128xf32, #tpu.memory_space<vmem>>, %arg4: memref<8x8x32xf32, #tpu.memory_space<vmem>>, %arg5: memref<8x32xf32, #tpu.memory_space<vmem>>, %arg6: memref<8x32xf32, #tpu.memory_space<vmem>>) attributes {dimension_semantics = [#tpu.dimension_semantics<parallel>, #tpu.dimension_semantics<arbitrary>], iteration_bounds = array<i64: 1, 1>, scalar_prefetch = 0 : i64, scratch_operands = 2 : i64, tpu.core_type = #tpu.core_type<tc>, window_params = [{transform_indices = @transform_0, window_bounds = array<i64: 8, 8, 128>}, {pipeline_mode = #tpu.pipeline_mode<synchronous>, transform_indices = @transform_1, window_bounds = array<i64: 32, 128>}, {transform_indices = @transform_2, window_bounds = array<i64: 8, 8, 32>}]} {
    %c0_i32 = arith.constant 0 : i32
    %0 = arith.cmpi eq, %arg1, %c0_i32 : i32
    %1 = arith.extui %0 : i1 to i32
    %c0_i32_0 = arith.constant 0 : i32
    %2 = arith.cmpi ne, %1, %c0_i32_0 : i32
    scf.if %2 {
      %cst_128 = arith.constant 0.000000e+00 : f32
      %235 = vector.broadcast %cst_128 : f32 to vector<8x32xf32>
      %c0_129 = arith.constant 0 : index
      %c0_130 = arith.constant 0 : index
      %236 = vector.load %arg5[%c0_129, %c0_130] : memref<8x32xf32, #tpu.memory_space<vmem>>, vector<8x32xf32>
      tpu.vector_store %arg5[%c0_129, %c0_130], %235 {strides = array<i32>} : memref<8x32xf32, #tpu.memory_space<vmem>>, vector<8x32xf32>,
      %cst_131 = arith.constant 0.000000e+00 : f32
      %237 = vector.broadcast %cst_131 : f32 to vector<8x32xf32>
      %c0_132 = arith.constant 0 : index
      %c0_133 = arith.constant 0 : index
      %238 = vector.load %arg6[%c0_132, %c0_133] : memref<8x32xf32, #tpu.memory_space<vmem>>, vector<8x32xf32>
      tpu.vector_store %arg6[%c0_132, %c0_133], %237 {strides = array<i32>} : memref<8x32xf32, #tpu.memory_space<vmem>>, vector<8x32xf32>,
    } else {
    }
    %c0_i32_1 = arith.constant 0 : i32
    %3 = arith.index_cast %c0_i32_1 : i32 to index
    %c0 = arith.constant 0 : index
    %c0_2 = arith.constant 0 : index
    %4 = vector.load %arg2[%3, %c0, %c0_2] : memref<8x8x128xf32, #tpu.memory_space<vmem>>, vector<1x8x128xf32>
    %5 = vector.shape_cast %4 : vector<1x8x128xf32> to vector<8x128xf32>
    %c0_3 = arith.constant 0 : index
    %c0_4 = arith.constant 0 : index
    %6 = vector.load %arg5[%c0_3, %c0_4] : memref<8x32xf32, #tpu.memory_space<vmem>>, vector<8x32xf32>
    %c0_5 = arith.constant 0 : index
    %c0_6 = arith.constant 0 : index
    %7 = vector.load %arg3[%c0_5, %c0_6] : memref<32x128xf32, #tpu.memory_space<vmem>>, vector<32x128xf32>
    %cst = arith.constant dense<0.000000e+00> : vector<8x128xf32>
    %8 = tpu.matmul %6, %7, %cst {dimension_numbers = #tpu.dot_dimension_numbers<[1], [0], [0], [1], [0, 0, 1, 1], [], []>} : vector<8x32xf32>, vector<32x128xf32>, vector<8x128xf32> -> vector<8x128xf32>
    %9 = arith.addf %5, %8 : vector<8x128xf32>
    %10 = arith.negf %9 : vector<8x128xf32>
    %11 = math.exp %10 : vector<8x128xf32>
    %cst_7 = arith.constant 1.000000e+00 : f32
    %12 = vector.broadcast %cst_7 : f32 to vector<8x128xf32>
    %13 = arith.addf %12, %11 : vector<8x128xf32>
    %14 = arith.divf %12, %13 : vector<8x128xf32>
    %15 = math.tanh %9 : vector<8x128xf32>
    %16 = vector.extract_strided_slice %14 {offsets = [0, 0], sizes = [8, 32], strides = [1, 1]} : vector<8x128xf32> to vector<8x32xf32>
    %17 = vector.extract_strided_slice %14 {offsets = [0, 32], sizes = [8, 32], strides = [1, 1]} : vector<8x128xf32> to vector<8x32xf32>
    %18 = vector.extract_strided_slice %15 {offsets = [0, 64], sizes = [8, 32], strides = [1, 1]} : vector<8x128xf32> to vector<8x32xf32>
    %19 = vector.extract_strided_slice %14 {offsets = [0, 96], sizes = [8, 32], strides = [1, 1]} : vector<8x128xf32> to vector<8x32xf32>
    %c0_8 = arith.constant 0 : index
    %c0_9 = arith.constant 0 : index
    %20 = vector.load %arg6[%c0_8, %c0_9] : memref<8x32xf32, #tpu.memory_space<vmem>>, vector<8x32xf32>
    %21 = arith.mulf %17, %20 : vector<8x32xf32>
    %22 = arith.mulf %16, %18 : vector<8x32xf32>
    %23 = arith.addf %21, %22 : vector<8x32xf32>
    %24 = math.tanh %23 : vector<8x32xf32>
    %25 = arith.mulf %19, %24 : vector<8x32xf32>
    %c0_10 = arith.constant 0 : index
    %c0_11 = arith.constant 0 : index
    %26 = vector.load %arg6[%c0_10, %c0_11] : memref<8x32xf32, #tpu.memory_space<vmem>>, vector<8x32xf32>
    tpu.vector_store %arg6[%c0_10, %c0_11], %23 {strides = array<i32>} : memref<8x32xf32, #tpu.memory_space<vmem>>, vector<8x32xf32>,
    %c0_12 = arith.constant 0 : index
    %c0_13 = arith.constant 0 : index
    %27 = vector.load %arg5[%c0_12, %c0_13] : memref<8x32xf32, #tpu.memory_space<vmem>>, vector<8x32xf32>
    tpu.vector_store %arg5[%c0_12, %c0_13], %25 {strides = array<i32>} : memref<8x32xf32, #tpu.memory_space<vmem>>, vector<8x32xf32>,
    %28 = arith.index_cast %c0_i32_1 : i32 to index
    %c0_14 = arith.constant 0 : index
    %c0_15 = arith.constant 0 : index
    %29 = vector.load %arg4[%28, %c0_14, %c0_15] : memref<8x8x32xf32, #tpu.memory_space<vmem>>, vector<1x8x32xf32>
    %30 = vector.shape_cast %29 : vector<1x8x32xf32> to vector<8x32xf32>
    %31 = vector.shape_cast %25 : vector<8x32xf32> to vector<1x8x32xf32>
    tpu.vector_store %arg4[%28, %c0_14, %c0_15], %31 {strides = array<i32>} : memref<8x8x32xf32, #tpu.memory_space<vmem>>, vector<1x8x32xf32>,
    %c1_i32 = arith.constant 1 : i32
    %32 = arith.index_cast %c1_i32 : i32 to index
    %c0_16 = arith.constant 0 : index
    %c0_17 = arith.constant 0 : index
    %33 = vector.load %arg2[%32, %c0_16, %c0_17] : memref<8x8x128xf32, #tpu.memory_space<vmem>>, vector<1x8x128xf32>
    %34 = vector.shape_cast %33 : vector<1x8x128xf32> to vector<8x128xf32>
    %c0_18 = arith.constant 0 : index
    %c0_19 = arith.constant 0 : index
    %35 = vector.load %arg5[%c0_18, %c0_19] : memref<8x32xf32, #tpu.memory_space<vmem>>, vector<8x32xf32>
    %c0_20 = arith.constant 0 : index
    %c0_21 = arith.constant 0 : index
    %36 = vector.load %arg3[%c0_20, %c0_21] : memref<32x128xf32, #tpu.memory_space<vmem>>, vector<32x128xf32>
    %cst_22 = arith.constant dense<0.000000e+00> : vector<8x128xf32>
    %37 = tpu.matmul %35, %36, %cst_22 {dimension_numbers = #tpu.dot_dimension_numbers<[1], [0], [0], [1], [0, 0, 1, 1], [], []>} : vector<8x32xf32>, vector<32x128xf32>, vector<8x128xf32> -> vector<8x128xf32>
    %38 = arith.addf %34, %37 : vector<8x128xf32>
    %39 = arith.negf %38 : vector<8x128xf32>
    %40 = math.exp %39 : vector<8x128xf32>
    %cst_23 = arith.constant 1.000000e+00 : f32
    %41 = vector.broadcast %cst_23 : f32 to vector<8x128xf32>
    %42 = arith.addf %41, %40 : vector<8x128xf32>
    %43 = arith.divf %41, %42 : vector<8x128xf32>
    %44 = math.tanh %38 : vector<8x128xf32>
    %45 = vector.extract_strided_slice %43 {offsets = [0, 0], sizes = [8, 32], strides = [1, 1]} : vector<8x128xf32> to vector<8x32xf32>
    %46 = vector.extract_strided_slice %43 {offsets = [0, 32], sizes = [8, 32], strides = [1, 1]} : vector<8x128xf32> to vector<8x32xf32>
    %47 = vector.extract_strided_slice %44 {offsets = [0, 64], sizes = [8, 32], strides = [1, 1]} : vector<8x128xf32> to vector<8x32xf32>
    %48 = vector.extract_strided_slice %43 {offsets = [0, 96], sizes = [8, 32], strides = [1, 1]} : vector<8x128xf32> to vector<8x32xf32>
    %c0_24 = arith.constant 0 : index
    %c0_25 = arith.constant 0 : index
    %49 = vector.load %arg6[%c0_24, %c0_25] : memref<8x32xf32, #tpu.memory_space<vmem>>, vector<8x32xf32>
    %50 = arith.mulf %46, %49 : vector<8x32xf32>
    %51 = arith.mulf %45, %47 : vector<8x32xf32>
    %52 = arith.addf %50, %51 : vector<8x32xf32>
    %53 = math.tanh %52 : vector<8x32xf32>
    %54 = arith.mulf %48, %53 : vector<8x32xf32>
    %c0_26 = arith.constant 0 : index
    %c0_27 = arith.constant 0 : index
    %55 = vector.load %arg6[%c0_26, %c0_27] : memref<8x32xf32, #tpu.memory_space<vmem>>, vector<8x32xf32>
    tpu.vector_store %arg6[%c0_26, %c0_27], %52 {strides = array<i32>} : memref<8x32xf32, #tpu.memory_space<vmem>>, vector<8x32xf32>,
    %c0_28 = arith.constant 0 : index
    %c0_29 = arith.constant 0 : index
    %56 = vector.load %arg5[%c0_28, %c0_29] : memref<8x32xf32, #tpu.memory_space<vmem>>, vector<8x32xf32>
    tpu.vector_store %arg5[%c0_28, %c0_29], %54 {strides = array<i32>} : memref<8x32xf32, #tpu.memory_space<vmem>>, vector<8x32xf32>,
    %57 = arith.index_cast %c1_i32 : i32 to index
    %c0_30 = arith.constant 0 : index
    %c0_31 = arith.constant 0 : index
    %58 = vector.load %arg4[%57, %c0_30, %c0_31] : memref<8x8x32xf32, #tpu.memory_space<vmem>>, vector<1x8x32xf32>
    %59 = vector.shape_cast %58 : vector<1x8x32xf32> to vector<8x32xf32>
    %60 = vector.shape_cast %54 : vector<8x32xf32> to vector<1x8x32xf32>
    tpu.vector_store %arg4[%57, %c0_30, %c0_31], %60 {strides = array<i32>} : memref<8x8x32xf32, #tpu.memory_space<vmem>>, vector<1x8x32xf32>,
    %c2_i32 = arith.constant 2 : i32
    %61 = arith.index_cast %c2_i32 : i32 to index
    %c0_32 = arith.constant 0 : index
    %c0_33 = arith.constant 0 : index
    %62 = vector.load %arg2[%61, %c0_32, %c0_33] : memref<8x8x128xf32, #tpu.memory_space<vmem>>, vector<1x8x128xf32>
    %63 = vector.shape_cast %62 : vector<1x8x128xf32> to vector<8x128xf32>
    %c0_34 = arith.constant 0 : index
    %c0_35 = arith.constant 0 : index
    %64 = vector.load %arg5[%c0_34, %c0_35] : memref<8x32xf32, #tpu.memory_space<vmem>>, vector<8x32xf32>
    %c0_36 = arith.constant 0 : index
    %c0_37 = arith.constant 0 : index
    %65 = vector.load %arg3[%c0_36, %c0_37] : memref<32x128xf32, #tpu.memory_space<vmem>>, vector<32x128xf32>
    %cst_38 = arith.constant dense<0.000000e+00> : vector<8x128xf32>
    %66 = tpu.matmul %64, %65, %cst_38 {dimension_numbers = #tpu.dot_dimension_numbers<[1], [0], [0], [1], [0, 0, 1, 1], [], []>} : vector<8x32xf32>, vector<32x128xf32>, vector<8x128xf32> -> vector<8x128xf32>
    %67 = arith.addf %63, %66 : vector<8x128xf32>
    %68 = arith.negf %67 : vector<8x128xf32>
    %69 = math.exp %68 : vector<8x128xf32>
    %cst_39 = arith.constant 1.000000e+00 : f32
    %70 = vector.broadcast %cst_39 : f32 to vector<8x128xf32>
    %71 = arith.addf %70, %69 : vector<8x128xf32>
    %72 = arith.divf %70, %71 : vector<8x128xf32>
    %73 = math.tanh %67 : vector<8x128xf32>
    %74 = vector.extract_strided_slice %72 {offsets = [0, 0], sizes = [8, 32], strides = [1, 1]} : vector<8x128xf32> to vector<8x32xf32>
    %75 = vector.extract_strided_slice %72 {offsets = [0, 32], sizes = [8, 32], strides = [1, 1]} : vector<8x128xf32> to vector<8x32xf32>
    %76 = vector.extract_strided_slice %73 {offsets = [0, 64], sizes = [8, 32], strides = [1, 1]} : vector<8x128xf32> to vector<8x32xf32>
    %77 = vector.extract_strided_slice %72 {offsets = [0, 96], sizes = [8, 32], strides = [1, 1]} : vector<8x128xf32> to vector<8x32xf32>
    %c0_40 = arith.constant 0 : index
    %c0_41 = arith.constant 0 : index
    %78 = vector.load %arg6[%c0_40, %c0_41] : memref<8x32xf32, #tpu.memory_space<vmem>>, vector<8x32xf32>
    %79 = arith.mulf %75, %78 : vector<8x32xf32>
    %80 = arith.mulf %74, %76 : vector<8x32xf32>
    %81 = arith.addf %79, %80 : vector<8x32xf32>
    %82 = math.tanh %81 : vector<8x32xf32>
    %83 = arith.mulf %77, %82 : vector<8x32xf32>
    %c0_42 = arith.constant 0 : index
    %c0_43 = arith.constant 0 : index
    %84 = vector.load %arg6[%c0_42, %c0_43] : memref<8x32xf32, #tpu.memory_space<vmem>>, vector<8x32xf32>
    tpu.vector_store %arg6[%c0_42, %c0_43], %81 {strides = array<i32>} : memref<8x32xf32, #tpu.memory_space<vmem>>, vector<8x32xf32>,
    %c0_44 = arith.constant 0 : index
    %c0_45 = arith.constant 0 : index
    %85 = vector.load %arg5[%c0_44, %c0_45] : memref<8x32xf32, #tpu.memory_space<vmem>>, vector<8x32xf32>
    tpu.vector_store %arg5[%c0_44, %c0_45], %83 {strides = array<i32>} : memref<8x32xf32, #tpu.memory_space<vmem>>, vector<8x32xf32>,
    %86 = arith.index_cast %c2_i32 : i32 to index
    %c0_46 = arith.constant 0 : index
    %c0_47 = arith.constant 0 : index
    %87 = vector.load %arg4[%86, %c0_46, %c0_47] : memref<8x8x32xf32, #tpu.memory_space<vmem>>, vector<1x8x32xf32>
    %88 = vector.shape_cast %87 : vector<1x8x32xf32> to vector<8x32xf32>
    %89 = vector.shape_cast %83 : vector<8x32xf32> to vector<1x8x32xf32>
    tpu.vector_store %arg4[%86, %c0_46, %c0_47], %89 {strides = array<i32>} : memref<8x8x32xf32, #tpu.memory_space<vmem>>, vector<1x8x32xf32>,
    %c3_i32 = arith.constant 3 : i32
    %90 = arith.index_cast %c3_i32 : i32 to index
    %c0_48 = arith.constant 0 : index
    %c0_49 = arith.constant 0 : index
    %91 = vector.load %arg2[%90, %c0_48, %c0_49] : memref<8x8x128xf32, #tpu.memory_space<vmem>>, vector<1x8x128xf32>
    %92 = vector.shape_cast %91 : vector<1x8x128xf32> to vector<8x128xf32>
    %c0_50 = arith.constant 0 : index
    %c0_51 = arith.constant 0 : index
    %93 = vector.load %arg5[%c0_50, %c0_51] : memref<8x32xf32, #tpu.memory_space<vmem>>, vector<8x32xf32>
    %c0_52 = arith.constant 0 : index
    %c0_53 = arith.constant 0 : index
    %94 = vector.load %arg3[%c0_52, %c0_53] : memref<32x128xf32, #tpu.memory_space<vmem>>, vector<32x128xf32>
    %cst_54 = arith.constant dense<0.000000e+00> : vector<8x128xf32>
    %95 = tpu.matmul %93, %94, %cst_54 {dimension_numbers = #tpu.dot_dimension_numbers<[1], [0], [0], [1], [0, 0, 1, 1], [], []>} : vector<8x32xf32>, vector<32x128xf32>, vector<8x128xf32> -> vector<8x128xf32>
    %96 = arith.addf %92, %95 : vector<8x128xf32>
    %97 = arith.negf %96 : vector<8x128xf32>
    %98 = math.exp %97 : vector<8x128xf32>
    %cst_55 = arith.constant 1.000000e+00 : f32
    %99 = vector.broadcast %cst_55 : f32 to vector<8x128xf32>
    %100 = arith.addf %99, %98 : vector<8x128xf32>
    %101 = arith.divf %99, %100 : vector<8x128xf32>
    %102 = math.tanh %96 : vector<8x128xf32>
    %103 = vector.extract_strided_slice %101 {offsets = [0, 0], sizes = [8, 32], strides = [1, 1]} : vector<8x128xf32> to vector<8x32xf32>
    %104 = vector.extract_strided_slice %101 {offsets = [0, 32], sizes = [8, 32], strides = [1, 1]} : vector<8x128xf32> to vector<8x32xf32>
    %105 = vector.extract_strided_slice %102 {offsets = [0, 64], sizes = [8, 32], strides = [1, 1]} : vector<8x128xf32> to vector<8x32xf32>
    %106 = vector.extract_strided_slice %101 {offsets = [0, 96], sizes = [8, 32], strides = [1, 1]} : vector<8x128xf32> to vector<8x32xf32>
    %c0_56 = arith.constant 0 : index
    %c0_57 = arith.constant 0 : index
    %107 = vector.load %arg6[%c0_56, %c0_57] : memref<8x32xf32, #tpu.memory_space<vmem>>, vector<8x32xf32>
    %108 = arith.mulf %104, %107 : vector<8x32xf32>
    %109 = arith.mulf %103, %105 : vector<8x32xf32>
    %110 = arith.addf %108, %109 : vector<8x32xf32>
    %111 = math.tanh %110 : vector<8x32xf32>
    %112 = arith.mulf %106, %111 : vector<8x32xf32>
    %c0_58 = arith.constant 0 : index
    %c0_59 = arith.constant 0 : index
    %113 = vector.load %arg6[%c0_58, %c0_59] : memref<8x32xf32, #tpu.memory_space<vmem>>, vector<8x32xf32>
    tpu.vector_store %arg6[%c0_58, %c0_59], %110 {strides = array<i32>} : memref<8x32xf32, #tpu.memory_space<vmem>>, vector<8x32xf32>,
    %c0_60 = arith.constant 0 : index
    %c0_61 = arith.constant 0 : index
    %114 = vector.load %arg5[%c0_60, %c0_61] : memref<8x32xf32, #tpu.memory_space<vmem>>, vector<8x32xf32>
    tpu.vector_store %arg5[%c0_60, %c0_61], %112 {strides = array<i32>} : memref<8x32xf32, #tpu.memory_space<vmem>>, vector<8x32xf32>,
    %115 = arith.index_cast %c3_i32 : i32 to index
    %c0_62 = arith.constant 0 : index
    %c0_63 = arith.constant 0 : index
    %116 = vector.load %arg4[%115, %c0_62, %c0_63] : memref<8x8x32xf32, #tpu.memory_space<vmem>>, vector<1x8x32xf32>
    %117 = vector.shape_cast %116 : vector<1x8x32xf32> to vector<8x32xf32>
    %118 = vector.shape_cast %112 : vector<8x32xf32> to vector<1x8x32xf32>
    tpu.vector_store %arg4[%115, %c0_62, %c0_63], %118 {strides = array<i32>} : memref<8x8x32xf32, #tpu.memory_space<vmem>>, vector<1x8x32xf32>,
    %c4_i32 = arith.constant 4 : i32
    %119 = arith.index_cast %c4_i32 : i32 to index
    %c0_64 = arith.constant 0 : index
    %c0_65 = arith.constant 0 : index
    %120 = vector.load %arg2[%119, %c0_64, %c0_65] : memref<8x8x128xf32, #tpu.memory_space<vmem>>, vector<1x8x128xf32>
    %121 = vector.shape_cast %120 : vector<1x8x128xf32> to vector<8x128xf32>
    %c0_66 = arith.constant 0 : index
    %c0_67 = arith.constant 0 : index
    %122 = vector.load %arg5[%c0_66, %c0_67] : memref<8x32xf32, #tpu.memory_space<vmem>>, vector<8x32xf32>
    %c0_68 = arith.constant 0 : index
    %c0_69 = arith.constant 0 : index
    %123 = vector.load %arg3[%c0_68, %c0_69] : memref<32x128xf32, #tpu.memory_space<vmem>>, vector<32x128xf32>
    %cst_70 = arith.constant dense<0.000000e+00> : vector<8x128xf32>
    %124 = tpu.matmul %122, %123, %cst_70 {dimension_numbers = #tpu.dot_dimension_numbers<[1], [0], [0], [1], [0, 0, 1, 1], [], []>} : vector<8x32xf32>, vector<32x128xf32>, vector<8x128xf32> -> vector<8x128xf32>
    %125 = arith.addf %121, %124 : vector<8x128xf32>
    %126 = arith.negf %125 : vector<8x128xf32>
    %127 = math.exp %126 : vector<8x128xf32>
    %cst_71 = arith.constant 1.000000e+00 : f32
    %128 = vector.broadcast %cst_71 : f32 to vector<8x128xf32>
    %129 = arith.addf %128, %127 : vector<8x128xf32>
    %130 = arith.divf %128, %129 : vector<8x128xf32>
    %131 = math.tanh %125 : vector<8x128xf32>
    %132 = vector.extract_strided_slice %130 {offsets = [0, 0], sizes = [8, 32], strides = [1, 1]} : vector<8x128xf32> to vector<8x32xf32>
    %133 = vector.extract_strided_slice %130 {offsets = [0, 32], sizes = [8, 32], strides = [1, 1]} : vector<8x128xf32> to vector<8x32xf32>
    %134 = vector.extract_strided_slice %131 {offsets = [0, 64], sizes = [8, 32], strides = [1, 1]} : vector<8x128xf32> to vector<8x32xf32>
    %135 = vector.extract_strided_slice %130 {offsets = [0, 96], sizes = [8, 32], strides = [1, 1]} : vector<8x128xf32> to vector<8x32xf32>
    %c0_72 = arith.constant 0 : index
    %c0_73 = arith.constant 0 : index
    %136 = vector.load %arg6[%c0_72, %c0_73] : memref<8x32xf32, #tpu.memory_space<vmem>>, vector<8x32xf32>
    %137 = arith.mulf %133, %136 : vector<8x32xf32>
    %138 = arith.mulf %132, %134 : vector<8x32xf32>
    %139 = arith.addf %137, %138 : vector<8x32xf32>
    %140 = math.tanh %139 : vector<8x32xf32>
    %141 = arith.mulf %135, %140 : vector<8x32xf32>
    %c0_74 = arith.constant 0 : index
    %c0_75 = arith.constant 0 : index
    %142 = vector.load %arg6[%c0_74, %c0_75] : memref<8x32xf32, #tpu.memory_space<vmem>>, vector<8x32xf32>
    tpu.vector_store %arg6[%c0_74, %c0_75], %139 {strides = array<i32>} : memref<8x32xf32, #tpu.memory_space<vmem>>, vector<8x32xf32>,
    %c0_76 = arith.constant 0 : index
    %c0_77 = arith.constant 0 : index
    %143 = vector.load %arg5[%c0_76, %c0_77] : memref<8x32xf32, #tpu.memory_space<vmem>>, vector<8x32xf32>
    tpu.vector_store %arg5[%c0_76, %c0_77], %141 {strides = array<i32>} : memref<8x32xf32, #tpu.memory_space<vmem>>, vector<8x32xf32>,
    %144 = arith.index_cast %c4_i32 : i32 to index
    %c0_78 = arith.constant 0 : index
    %c0_79 = arith.constant 0 : index
    %145 = vector.load %arg4[%144, %c0_78, %c0_79] : memref<8x8x32xf32, #tpu.memory_space<vmem>>, vector<1x8x32xf32>
    %146 = vector.shape_cast %145 : vector<1x8x32xf32> to vector<8x32xf32>
    %147 = vector.shape_cast %141 : vector<8x32xf32> to vector<1x8x32xf32>
    tpu.vector_store %arg4[%144, %c0_78, %c0_79], %147 {strides = array<i32>} : memref<8x8x32xf32, #tpu.memory_space<vmem>>, vector<1x8x32xf32>,
    %c5_i32 = arith.constant 5 : i32
    %148 = arith.index_cast %c5_i32 : i32 to index
    %c0_80 = arith.constant 0 : index
    %c0_81 = arith.constant 0 : index
    %149 = vector.load %arg2[%148, %c0_80, %c0_81] : memref<8x8x128xf32, #tpu.memory_space<vmem>>, vector<1x8x128xf32>
    %150 = vector.shape_cast %149 : vector<1x8x128xf32> to vector<8x128xf32>
    %c0_82 = arith.constant 0 : index
    %c0_83 = arith.constant 0 : index
    %151 = vector.load %arg5[%c0_82, %c0_83] : memref<8x32xf32, #tpu.memory_space<vmem>>, vector<8x32xf32>
    %c0_84 = arith.constant 0 : index
    %c0_85 = arith.constant 0 : index
    %152 = vector.load %arg3[%c0_84, %c0_85] : memref<32x128xf32, #tpu.memory_space<vmem>>, vector<32x128xf32>
    %cst_86 = arith.constant dense<0.000000e+00> : vector<8x128xf32>
    %153 = tpu.matmul %151, %152, %cst_86 {dimension_numbers = #tpu.dot_dimension_numbers<[1], [0], [0], [1], [0, 0, 1, 1], [], []>} : vector<8x32xf32>, vector<32x128xf32>, vector<8x128xf32> -> vector<8x128xf32>
    %154 = arith.addf %150, %153 : vector<8x128xf32>
    %155 = arith.negf %154 : vector<8x128xf32>
    %156 = math.exp %155 : vector<8x128xf32>
    %cst_87 = arith.constant 1.000000e+00 : f32
    %157 = vector.broadcast %cst_87 : f32 to vector<8x128xf32>
    %158 = arith.addf %157, %156 : vector<8x128xf32>
    %159 = arith.divf %157, %158 : vector<8x128xf32>
    %160 = math.tanh %154 : vector<8x128xf32>
    %161 = vector.extract_strided_slice %159 {offsets = [0, 0], sizes = [8, 32], strides = [1, 1]} : vector<8x128xf32> to vector<8x32xf32>
    %162 = vector.extract_strided_slice %159 {offsets = [0, 32], sizes = [8, 32], strides = [1, 1]} : vector<8x128xf32> to vector<8x32xf32>
    %163 = vector.extract_strided_slice %160 {offsets = [0, 64], sizes = [8, 32], strides = [1, 1]} : vector<8x128xf32> to vector<8x32xf32>
    %164 = vector.extract_strided_slice %159 {offsets = [0, 96], sizes = [8, 32], strides = [1, 1]} : vector<8x128xf32> to vector<8x32xf32>
    %c0_88 = arith.constant 0 : index
    %c0_89 = arith.constant 0 : index
    %165 = vector.load %arg6[%c0_88, %c0_89] : memref<8x32xf32, #tpu.memory_space<vmem>>, vector<8x32xf32>
    %166 = arith.mulf %162, %165 : vector<8x32xf32>
    %167 = arith.mulf %161, %163 : vector<8x32xf32>
    %168 = arith.addf %166, %167 : vector<8x32xf32>
    %169 = math.tanh %168 : vector<8x32xf32>
    %170 = arith.mulf %164, %169 : vector<8x32xf32>
    %c0_90 = arith.constant 0 : index
    %c0_91 = arith.constant 0 : index
    %171 = vector.load %arg6[%c0_90, %c0_91] : memref<8x32xf32, #tpu.memory_space<vmem>>, vector<8x32xf32>
    tpu.vector_store %arg6[%c0_90, %c0_91], %168 {strides = array<i32>} : memref<8x32xf32, #tpu.memory_space<vmem>>, vector<8x32xf32>,
    %c0_92 = arith.constant 0 : index
    %c0_93 = arith.constant 0 : index
    %172 = vector.load %arg5[%c0_92, %c0_93] : memref<8x32xf32, #tpu.memory_space<vmem>>, vector<8x32xf32>
    tpu.vector_store %arg5[%c0_92, %c0_93], %170 {strides = array<i32>} : memref<8x32xf32, #tpu.memory_space<vmem>>, vector<8x32xf32>,
    %173 = arith.index_cast %c5_i32 : i32 to index
    %c0_94 = arith.constant 0 : index
    %c0_95 = arith.constant 0 : index
    %174 = vector.load %arg4[%173, %c0_94, %c0_95] : memref<8x8x32xf32, #tpu.memory_space<vmem>>, vector<1x8x32xf32>
    %175 = vector.shape_cast %174 : vector<1x8x32xf32> to vector<8x32xf32>
    %176 = vector.shape_cast %170 : vector<8x32xf32> to vector<1x8x32xf32>
    tpu.vector_store %arg4[%173, %c0_94, %c0_95], %176 {strides = array<i32>} : memref<8x8x32xf32, #tpu.memory_space<vmem>>, vector<1x8x32xf32>,
    %c6_i32 = arith.constant 6 : i32
    %177 = arith.index_cast %c6_i32 : i32 to index
    %c0_96 = arith.constant 0 : index
    %c0_97 = arith.constant 0 : index
    %178 = vector.load %arg2[%177, %c0_96, %c0_97] : memref<8x8x128xf32, #tpu.memory_space<vmem>>, vector<1x8x128xf32>
    %179 = vector.shape_cast %178 : vector<1x8x128xf32> to vector<8x128xf32>
    %c0_98 = arith.constant 0 : index
    %c0_99 = arith.constant 0 : index
    %180 = vector.load %arg5[%c0_98, %c0_99] : memref<8x32xf32, #tpu.memory_space<vmem>>, vector<8x32xf32>
    %c0_100 = arith.constant 0 : index
    %c0_101 = arith.constant 0 : index
    %181 = vector.load %arg3[%c0_100, %c0_101] : memref<32x128xf32, #tpu.memory_space<vmem>>, vector<32x128xf32>
    %cst_102 = arith.constant dense<0.000000e+00> : vector<8x128xf32>
    %182 = tpu.matmul %180, %181, %cst_102 {dimension_numbers = #tpu.dot_dimension_numbers<[1], [0], [0], [1], [0, 0, 1, 1], [], []>} : vector<8x32xf32>, vector<32x128xf32>, vector<8x128xf32> -> vector<8x128xf32>
    %183 = arith.addf %179, %182 : vector<8x128xf32>
    %184 = arith.negf %183 : vector<8x128xf32>
    %185 = math.exp %184 : vector<8x128xf32>
    %cst_103 = arith.constant 1.000000e+00 : f32
    %186 = vector.broadcast %cst_103 : f32 to vector<8x128xf32>
    %187 = arith.addf %186, %185 : vector<8x128xf32>
    %188 = arith.divf %186, %187 : vector<8x128xf32>
    %189 = math.tanh %183 : vector<8x128xf32>
    %190 = vector.extract_strided_slice %188 {offsets = [0, 0], sizes = [8, 32], strides = [1, 1]} : vector<8x128xf32> to vector<8x32xf32>
    %191 = vector.extract_strided_slice %188 {offsets = [0, 32], sizes = [8, 32], strides = [1, 1]} : vector<8x128xf32> to vector<8x32xf32>
    %192 = vector.extract_strided_slice %189 {offsets = [0, 64], sizes = [8, 32], strides = [1, 1]} : vector<8x128xf32> to vector<8x32xf32>
    %193 = vector.extract_strided_slice %188 {offsets = [0, 96], sizes = [8, 32], strides = [1, 1]} : vector<8x128xf32> to vector<8x32xf32>
    %c0_104 = arith.constant 0 : index
    %c0_105 = arith.constant 0 : index
    %194 = vector.load %arg6[%c0_104, %c0_105] : memref<8x32xf32, #tpu.memory_space<vmem>>, vector<8x32xf32>
    %195 = arith.mulf %191, %194 : vector<8x32xf32>
    %196 = arith.mulf %190, %192 : vector<8x32xf32>
    %197 = arith.addf %195, %196 : vector<8x32xf32>
    %198 = math.tanh %197 : vector<8x32xf32>
    %199 = arith.mulf %193, %198 : vector<8x32xf32>
    %c0_106 = arith.constant 0 : index
    %c0_107 = arith.constant 0 : index
    %200 = vector.load %arg6[%c0_106, %c0_107] : memref<8x32xf32, #tpu.memory_space<vmem>>, vector<8x32xf32>
    tpu.vector_store %arg6[%c0_106, %c0_107], %197 {strides = array<i32>} : memref<8x32xf32, #tpu.memory_space<vmem>>, vector<8x32xf32>,
    %c0_108 = arith.constant 0 : index
    %c0_109 = arith.constant 0 : index
    %201 = vector.load %arg5[%c0_108, %c0_109] : memref<8x32xf32, #tpu.memory_space<vmem>>, vector<8x32xf32>
    tpu.vector_store %arg5[%c0_108, %c0_109], %199 {strides = array<i32>} : memref<8x32xf32, #tpu.memory_space<vmem>>, vector<8x32xf32>,
    %202 = arith.index_cast %c6_i32 : i32 to index
    %c0_110 = arith.constant 0 : index
    %c0_111 = arith.constant 0 : index
    %203 = vector.load %arg4[%202, %c0_110, %c0_111] : memref<8x8x32xf32, #tpu.memory_space<vmem>>, vector<1x8x32xf32>
    %204 = vector.shape_cast %203 : vector<1x8x32xf32> to vector<8x32xf32>
    %205 = vector.shape_cast %199 : vector<8x32xf32> to vector<1x8x32xf32>
    tpu.vector_store %arg4[%202, %c0_110, %c0_111], %205 {strides = array<i32>} : memref<8x8x32xf32, #tpu.memory_space<vmem>>, vector<1x8x32xf32>,
    %c7_i32 = arith.constant 7 : i32
    %206 = arith.index_cast %c7_i32 : i32 to index
    %c0_112 = arith.constant 0 : index
    %c0_113 = arith.constant 0 : index
    %207 = vector.load %arg2[%206, %c0_112, %c0_113] : memref<8x8x128xf32, #tpu.memory_space<vmem>>, vector<1x8x128xf32>
    %208 = vector.shape_cast %207 : vector<1x8x128xf32> to vector<8x128xf32>
    %c0_114 = arith.constant 0 : index
    %c0_115 = arith.constant 0 : index
    %209 = vector.load %arg5[%c0_114, %c0_115] : memref<8x32xf32, #tpu.memory_space<vmem>>, vector<8x32xf32>
    %c0_116 = arith.constant 0 : index
    %c0_117 = arith.constant 0 : index
    %210 = vector.load %arg3[%c0_116, %c0_117] : memref<32x128xf32, #tpu.memory_space<vmem>>, vector<32x128xf32>
    %cst_118 = arith.constant dense<0.000000e+00> : vector<8x128xf32>
    %211 = tpu.matmul %209, %210, %cst_118 {dimension_numbers = #tpu.dot_dimension_numbers<[1], [0], [0], [1], [0, 0, 1, 1], [], []>} : vector<8x32xf32>, vector<32x128xf32>, vector<8x128xf32> -> vector<8x128xf32>
    %212 = arith.addf %208, %211 : vector<8x128xf32>
    %213 = arith.negf %212 : vector<8x128xf32>
    %214 = math.exp %213 : vector<8x128xf32>
    %cst_119 = arith.constant 1.000000e+00 : f32
    %215 = vector.broadcast %cst_119 : f32 to vector<8x128xf32>
    %216 = arith.addf %215, %214 : vector<8x128xf32>
    %217 = arith.divf %215, %216 : vector<8x128xf32>
    %218 = math.tanh %212 : vector<8x128xf32>
    %219 = vector.extract_strided_slice %217 {offsets = [0, 0], sizes = [8, 32], strides = [1, 1]} : vector<8x128xf32> to vector<8x32xf32>
    %220 = vector.extract_strided_slice %217 {offsets = [0, 32], sizes = [8, 32], strides = [1, 1]} : vector<8x128xf32> to vector<8x32xf32>
    %221 = vector.extract_strided_slice %218 {offsets = [0, 64], sizes = [8, 32], strides = [1, 1]} : vector<8x128xf32> to vector<8x32xf32>
    %222 = vector.extract_strided_slice %217 {offsets = [0, 96], sizes = [8, 32], strides = [1, 1]} : vector<8x128xf32> to vector<8x32xf32>
    %c0_120 = arith.constant 0 : index
    %c0_121 = arith.constant 0 : index
    %223 = vector.load %arg6[%c0_120, %c0_121] : memref<8x32xf32, #tpu.memory_space<vmem>>, vector<8x32xf32>
    %224 = arith.mulf %220, %223 : vector<8x32xf32>
    %225 = arith.mulf %219, %221 : vector<8x32xf32>
    %226 = arith.addf %224, %225 : vector<8x32xf32>
    %227 = math.tanh %226 : vector<8x32xf32>
    %228 = arith.mulf %222, %227 : vector<8x32xf32>
    %c0_122 = arith.constant 0 : index
    %c0_123 = arith.constant 0 : index
    %229 = vector.load %arg6[%c0_122, %c0_123] : memref<8x32xf32, #tpu.memory_space<vmem>>, vector<8x32xf32>
    tpu.vector_store %arg6[%c0_122, %c0_123], %226 {strides = array<i32>} : memref<8x32xf32, #tpu.memory_space<vmem>>, vector<8x32xf32>,
    %c0_124 = arith.constant 0 : index
    %c0_125 = arith.constant 0 : index
    %230 = vector.load %arg5[%c0_124, %c0_125] : memref<8x32xf32, #tpu.memory_space<vmem>>, vector<8x32xf32>
    tpu.vector_store %arg5[%c0_124, %c0_125], %228 {strides = array<i32>} : memref<8x32xf32, #tpu.memory_space<vmem>>, vector<8x32xf32>,
    %231 = arith.index_cast %c7_i32 : i32 to index
    %c0_126 = arith.constant 0 : index
    %c0_127 = arith.constant 0 : index
    %232 = vector.load %arg4[%231, %c0_126, %c0_127] : memref<8x8x32xf32, #tpu.memory_space<vmem>>, vector<1x8x32xf32>
    %233 = vector.shape_cast %232 : vector<1x8x32xf32> to vector<8x32xf32>
    %234 = vector.shape_cast %228 : vector<8x32xf32> to vector<1x8x32xf32>
    tpu.vector_store %arg4[%231, %c0_126, %c0_127], %234 {strides = array<i32>} : memref<8x8x32xf32, #tpu.memory_space<vmem>>, vector<1x8x32xf32>,
    %c8_i32 = arith.constant 8 : i32
    return
  }
  func.func @transform_0(%arg0: i32, %arg1: i32) -> (i32, i32, i32) {
    %c0_i32 = arith.constant 0 : i32
    %c0_i32_0 = arith.constant 0 : i32
    return %arg1, %arg0, %c0_i32 : i32, i32, i32
  }
  func.func @transform_1(%arg0: i32, %arg1: i32) -> (i32, i32) {
    %c0_i32 = arith.constant 0 : i32
    %c0_i32_0 = arith.constant 0 : i32
    %c0_i32_1 = arith.constant 0 : i32
    return %c0_i32, %c0_i32_0 : i32, i32
  }
  func.func @transform_2(%arg0: i32, %arg1: i32) -> (i32, i32, i32) {
    %c0_i32 = arith.constant 0 : i32
    %c0_i32_0 = arith.constant 0 : i32
    return %arg1, %arg0, %c0_i32 : i32, i32, i32
  }
}

</mosaic_0001>

<llo_original>
// kernel: tpu_custom_call.1
$region0: #{tpu_custom_call.1}
  #allocation0 [shape = 'u32[]', space=smem, size = 0x4, offset = 0x4, fixed_abs, tag = 'smem constant byte address 0x4 - core index']
  #allocation1 [shape = 'u32[72,128]{1,0:T(1,128)}', space=vmem, size = 0x9000, scoped, tag = 'internal scratch']
  #allocation2 [shape = 'f32[8,32]{1,0:T(8,128)}', space=vmem, size = 0x1000, scoped, tag = 'scratch operand']
  #allocation3 [shape = 'f32[8,32]{1,0:T(8,128)}', space=vmem, size = 0x1000, scoped, tag = 'scratch operand']
  %s0 = inlined_call_operand.hbm [shape: f32[8,8,128], index: 0, kind: input, shape index: {}]
  %s1 = inlined_call_operand.hbm [shape: f32[32,128], index: 1, kind: input, shape index: {}]
  %s2 = inlined_call_operand.hbm [shape: f32[8,8,32], index: 2, kind: output, shape index: {}]
  %s3 = sld [smem:[#allocation0]]
  $region30: #{tpu_custom_call.1} parent=0
    _
  %s5 = ssub.s32 1, %s3
  %s6 = scalar_select 0, %s5, %s3
  $region1: #{tpu_custom_call.1} parent=0
    #allocation4 [shape = 'u8[32768]{0}', space=vmem, size = 0x8000, scoped, tag = 'input window, operand 0, single buffered']
    #allocation5 [shape = 's32[1]{0}', space=sflag, size = 0x4, scoped, tag = 'scoped memory for tpu_custom_call.1']
    #allocation6 [shape = 's32[1]{0}', space=sflag, size = 0x4, scoped, tag = 'scoped memory for tpu_custom_call.1']
    #allocation7 [shape = 'u8[16384]{0}', space=vmem, size = 0x4000, scoped, tag = 'input window, operand 1, single buffered']
    #allocation8 [shape = 's32[1]{0}', space=sflag, size = 0x4, scoped, tag = 'scoped memory for tpu_custom_call.1']
    #allocation9 [shape = 'u8[32768]{0}', space=vmem, size = 0x8000, scoped, tag = 'output window, operand 0, single buffered']
    %7 = vsyncpa [#allocation5], 0
    %8 = vsyncpa [#allocation8], 0
    %9 = vsyncpa [#allocation6], 0
    // Predicated region
    $region2: #{tpu_custom_call.1} parent=1 // pred_check
      _
    $region3: #{tpu_custom_call.1} parent=1 // pred_check_branch
      %11 = sbr.rel (0) target = $region5
    $region4: #{tpu_custom_call.1} parent=1 // pred_region
      %13 = vsyncadd [#allocation5], 0
      %s14 = sshll.u32 %s0, 4
      %s15 = int_to_ptr.hbm [resolvable:$true] %s14
      %s16 = sshll.u32 [#allocation4], 4
      %s17 = int_to_ptr.vmem [resolvable:$true] %s16
      %22 = dma.hbm_to_vmem [thread:$0]  %s15, 1024, %s17, [#allocation5], 128, 128, 8
    $region5: #{tpu_custom_call.1} parent=1 // pred_fallthru
      _
    // Predicated region
    $region6: #{tpu_custom_call.1} parent=1 // pred_check
      _
    $region7: #{tpu_custom_call.1} parent=1 // pred_check_branch
      %24 = sbr.rel (0) target = $region9
    $region8: #{tpu_custom_call.1} parent=1 // pred_region
      %26 = vsyncadd [#allocation8], 0
      %s27 = sshll.u32 %s1, 4
      %s28 = int_to_ptr.hbm [resolvable:$true] %s27
      %s29 = sshll.u32 [#allocation7], 4
      %s30 = int_to_ptr.vmem [resolvable:$true] %s29
      %35 = dma.hbm_to_vmem [thread:$0]  %s28, 512, %s30, [#allocation8], 128, 128, 8
    $region9: #{tpu_custom_call.1} parent=1 // pred_fallthru
      _
    // Predicated region
    $region10: #{tpu_custom_call.1} parent=1 // pred_check
      _
    $region11: #{tpu_custom_call.1} parent=1 // pred_check_branch
      %37 = sbr.rel (0) target = $region13
    $region12: #{tpu_custom_call.1} parent=1 // pred_region
      %39 = dma.done [#allocation5], 1024
    $region13: #{tpu_custom_call.1} parent=1 // pred_fallthru
      _
    // Predicated region
    $region14: #{tpu_custom_call.1} parent=1 // pred_check
      _
    $region15: #{tpu_custom_call.1} parent=1 // pred_check_branch
      %41 = sbr.rel (0) target = $region17
    $region16: #{tpu_custom_call.1} parent=1 // pred_region
      %43 = dma.done [#allocation8], 512
    $region17: #{tpu_custom_call.1} parent=1 // pred_fallthru
      _
    %p44 = scmp.eq.s32.totalorder 0, 0
    // Predicated region
    $region18: #{tpu_custom_call.1} parent=1 // pred_check
      %p45 = pneg %p44
    $region19: #{tpu_custom_call.1} parent=1 // pred_check_branch
      %47 = sbr.rel (%p45) target = $region21
    $region20: #{tpu_custom_call.1} parent=1 // pred_region
      %vm48 = vcmask 261120
      %49 = vst.msk [vmem:[#allocation2] sm:$0xff] %vm48, 0.0
      %50 = vst.msk [vmem:[#allocation3] sm:$0xff] %vm48, 0.0
    $region21: #{tpu_custom_call.1} parent=1 // pred_fallthru
      _
    %v51 = vld [vmem:[#allocation4] sm:$0xff]
    %v52 = vld [vmem:[#allocation2] sm:$0xff]
    %v53 = vld [vmem:[#allocation7] sm:$0xff]
    %v54 = vld [vmem:[#allocation7 + $0x8] sm:$0xff]
    %v55 = vld [vmem:[#allocation7 + $0x10] sm:$0xff]
    %v56 = vld [vmem:[#allocation7 + $0x18] sm:$0xff]
    %vm57 = vcmask 261120
    %v59 = vsel %vm57, %v52, 0
    %61 = vmatpush.msra.mxu0 0.0
    %62 = vmatpush.msra.mxu0 0.0
    %63 = vmatpush.msra.mxu0 0.0
    %64 = vmatpush.msra.mxu0 0.0
    %65 = vmatpush.msra.mxu0 0.0
    %66 = vmatpush.msra.mxu0 0.0
    %67 = vmatpush.msra.mxu0 0.0
    %68 = vmatpush.msra.mxu0 0.0
    %69 = vmatpush.msra.mxu0 0.0
    %70 = vmatpush.msra.mxu0 0.0
    %71 = vmatpush.msra.mxu0 0.0
    %72 = vmatpush.msra.mxu0 0.0
    %73 = vmatpush.msra.mxu0 %v56
    %74 = vmatpush.msra.mxu0 %v55
    %75 = vmatpush.msra.mxu0 %v54
    %76 = vmatpush.msra.mxu0 %v53
    %77 = vmatmul.f32.gmra.mxu0 %v59
    %v78 = vpop.f32.mrf.mxu0
    %v79 = vadd.f32 0.0, %v78
    %80 = vdwg.mxu0
    %v81 = vadd.f32 %v51, %v79
    %v82 = vxor.u32 %v81, 2147483648
    %v83 = vmul.f32 %v82, 1.442695
    %v84 = vpow.pop %v83
    %v85 = vadd.f32 %v84, 1.0
    %v86 = vrcp.pop %v85
    %v87 = vmul.f32 %v85, %v86
    %v88 = vsub.f32 1.0, %v87
    %v89 = vmul.f32 %v86, %v88
    %v90 = vadd.f32 %v86, %v89
    %vm91 = vweird.f32 %v85
    %vm92 = vweird.f32 %v86
    %vm93 = vmor %vm91, %vm92
    %v94 = vsel %vm93, %v86, %v90
    %v95 = vand.u32 2147483647, %v85
    %vm96 = vcmp.eq.f32.partialorder %v95, 8.507059e+37
    %v97 = vand.u32 %v85, 2147483648
    %v98 = vor.u32 1.1754944e-38, %v97
    %v99 = vsel %vm96, %v98, %v94
    %v100 = vmul.f32 1.0, %v99
    %v101 = vtanh.pop %v81
    %v102 = vld [vmem:[#allocation3] sm:$0xff]
    %104 = vrot.lane.b32.xlu0 %v102, 32
    %v105 = vpop.permute.xlu0 %104
    %v107 = vmul.f32 %v100, %v105
    %109 = vrot.lane.b32.xlu0 %v101, 64
    %v110 = vpop.permute.xlu0 %109
    %v112 = vmul.f32 %v100, %v110
    %114 = vrot.lane.b32.xlu0 %v112, 32
    %v115 = vpop.permute.xlu0 %114
    %v117 = vadd.f32 %v107, %v115
    %v118 = vtanh.pop %v117
    %120 = vrot.lane.b32.xlu0 %v118, 64
    %v121 = vpop.permute.xlu0 %120
    %v123 = vmul.f32 %v100, %v121
    %125 = vrot.lane.b32.xlu0 %v117, 96
    %v126 = vpop.permute.xlu0 %125
    %128 = vst.msk [vmem:[#allocation3] sm:$0xff] %vm57, %v126
    %130 = vrot.lane.b32.xlu0 %v123, 32
    %v131 = vpop.permute.xlu0 %130
    %133 = vst.msk [vmem:[#allocation2] sm:$0xff] %vm57, %v131
    %134 = vst.msk [vmem:[#allocation9] sm:$0xff] %vm57, %v131
    %s135 = scalar_lea.vmem [#allocation4], 8
    %v136 = vld [vmem:[%s135] sm:$0xff]
    %v137 = vld [vmem:[#allocation2] sm:$0xff]
    %v138 = vld [vmem:[#allocation7] sm:$0xff]
    %v139 = vld [vmem:[#allocation7 + $0x8] sm:$0xff]
    %v140 = vld [vmem:[#allocation7 + $0x10] sm:$0xff]
    %v141 = vld [vmem:[#allocation7 + $0x18] sm:$0xff]
    %v143 = vsel %vm57, %v137, 0
    %145 = vmatpush.msra.mxu0 0.0
    %146 = vmatpush.msra.mxu0 0.0
    %147 = vmatpush.msra.mxu0 0.0
    %148 = vmatpush.msra.mxu0 0.0
    %149 = vmatpush.msra.mxu0 0.0
    %150 = vmatpush.msra.mxu0 0.0
    %151 = vmatpush.msra.mxu0 0.0
    %152 = vmatpush.msra.mxu0 0.0
    %153 = vmatpush.msra.mxu0 0.0
    %154 = vmatpush.msra.mxu0 0.0
    %155 = vmatpush.msra.mxu0 0.0
    %156 = vmatpush.msra.mxu0 0.0
    %157 = vmatpush.msra.mxu0 %v141
    %158 = vmatpush.msra.mxu0 %v140
    %159 = vmatpush.msra.mxu0 %v139
    %160 = vmatpush.msra.mxu0 %v138
    %161 = vmatmul.f32.gmra.mxu0 %v143
    %v162 = vpop.f32.mrf.mxu0
    %v163 = vadd.f32 0.0, %v162
    %164 = vdwg.mxu0
    %v165 = vadd.f32 %v136, %v163
    %v166 = vxor.u32 %v165, 2147483648
    %v167 = vmul.f32 %v166, 1.442695
    %v168 = vpow.pop %v167
    %v169 = vadd.f32 %v168, 1.0
    %v170 = vrcp.pop %v169
    %v171 = vmul.f32 %v169, %v170
    %v172 = vsub.f32 1.0, %v171
    %v173 = vmul.f32 %v170, %v172
    %v174 = vadd.f32 %v170, %v173
    %vm175 = vweird.f32 %v169
    %vm176 = vweird.f32 %v170
    %vm177 = vmor %vm175, %vm176
    %v178 = vsel %vm177, %v170, %v174
    %v179 = vand.u32 2147483647, %v169
    %vm180 = vcmp.eq.f32.partialorder %v179, 8.507059e+37
    %v181 = vand.u32 %v169, 2147483648
    %v182 = vor.u32 1.1754944e-38, %v181
    %v183 = vsel %vm180, %v182, %v178
    %v184 = vmul.f32 1.0, %v183
    %v185 = vtanh.pop %v165
    %v186 = vld [vmem:[#allocation3] sm:$0xff]
    %188 = vrot.lane.b32.xlu0 %v186, 32
    %v189 = vpop.permute.xlu0 %188
    %v191 = vmul.f32 %v184, %v189
    %193 = vrot.lane.b32.xlu0 %v185, 64
    %v194 = vpop.permute.xlu0 %193
    %v196 = vmul.f32 %v184, %v194
    %198 = vrot.lane.b32.xlu0 %v196, 32
    %v199 = vpop.permute.xlu0 %198
    %v201 = vadd.f32 %v191, %v199
    %v202 = vtanh.pop %v201
    %204 = vrot.lane.b32.xlu0 %v202, 64
    %v205 = vpop.permute.xlu0 %204
    %v207 = vmul.f32 %v184, %v205
    %209 = vrot.lane.b32.xlu0 %v201, 96
    %v210 = vpop.permute.xlu0 %209
    %212 = vst.msk [vmem:[#allocation3] sm:$0xff] %vm57, %v210
    %214 = vrot.lane.b32.xlu0 %v207, 32
    %v215 = vpop.permute.xlu0 %214
    %217 = vst.msk [vmem:[#allocation2] sm:$0xff] %vm57, %v215
    %s218 = scalar_lea.vmem [#allocation9], 8
    %219 = vst.msk [vmem:[%s218] sm:$0xff] %vm57, %v215
    %s220 = scalar_lea.vmem [#allocation4], 16
    %v221 = vld [vmem:[%s220] sm:$0xff]
    %v222 = vld [vmem:[#allocation2] sm:$0xff]
    %v223 = vld [vmem:[#allocation7] sm:$0xff]
    %v224 = vld [vmem:[#allocation7 + $0x8] sm:$0xff]
    %v225 = vld [vmem:[#allocation7 + $0x10] sm:$0xff]
    %v226 = vld [vmem:[#allocation7 + $0x18] sm:$0xff]
    %v228 = vsel %vm57, %v222, 0
    %230 = vmatpush.msra.mxu0 0.0
    %231 = vmatpush.msra.mxu0 0.0
    %232 = vmatpush.msra.mxu0 0.0
    %233 = vmatpush.msra.mxu0 0.0
    %234 = vmatpush.msra.mxu0 0.0
    %235 = vmatpush.msra.mxu0 0.0
    %236 = vmatpush.msra.mxu0 0.0
    %237 = vmatpush.msra.mxu0 0.0
    %238 = vmatpush.msra.mxu0 0.0
    %239 = vmatpush.msra.mxu0 0.0
    %240 = vmatpush.msra.mxu0 0.0
    %241 = vmatpush.msra.mxu0 0.0
    %242 = vmatpush.msra.mxu0 %v226
    %243 = vmatpush.msra.mxu0 %v225
    %244 = vmatpush.msra.mxu0 %v224
    %245 = vmatpush.msra.mxu0 %v223
    %246 = vmatmul.f32.gmra.mxu0 %v228
    %v247 = vpop.f32.mrf.mxu0
    %v248 = vadd.f32 0.0, %v247
    %249 = vdwg.mxu0
    %v250 = vadd.f32 %v221, %v248
    %v251 = vxor.u32 %v250, 2147483648
    %v252 = vmul.f32 %v251, 1.442695
    %v253 = vpow.pop %v252
    %v254 = vadd.f32 %v253, 1.0
    %v255 = vrcp.pop %v254
    %v256 = vmul.f32 %v254, %v255
    %v257 = vsub.f32 1.0, %v256
    %v258 = vmul.f32 %v255, %v257
    %v259 = vadd.f32 %v255, %v258
    %vm260 = vweird.f32 %v254
    %vm261 = vweird.f32 %v255
    %vm262 = vmor %vm260, %vm261
    %v263 = vsel %vm262, %v255, %v259
    %v264 = vand.u32 2147483647, %v254
    %vm265 = vcmp.eq.f32.partialorder %v264, 8.507059e+37
    %v266 = vand.u32 %v254, 2147483648
    %v267 = vor.u32 1.1754944e-38, %v266
    %v268 = vsel %vm265, %v267, %v263
    %v269 = vmul.f32 1.0, %v268
    %v270 = vtanh.pop %v250
    %v271 = vld [vmem:[#allocation3] sm:$0xff]
    %273 = vrot.lane.b32.xlu0 %v271, 32
    %v274 = vpop.permute.xlu0 %273
    %v276 = vmul.f32 %v269, %v274
    %278 = vrot.lane.b32.xlu0 %v270, 64
    %v279 = vpop.permute.xlu0 %278
    %v281 = vmul.f32 %v269, %v279
    %283 = vrot.lane.b32.xlu0 %v281, 32
    %v284 = vpop.permute.xlu0 %283
    %v286 = vadd.f32 %v276, %v284
    %v287 = vtanh.pop %v286
    %289 = vrot.lane.b32.xlu0 %v287, 64
    %v290 = vpop.permute.xlu0 %289
    %v292 = vmul.f32 %v269, %v290
    %294 = vrot.lane.b32.xlu0 %v286, 96
    %v295 = vpop.permute.xlu0 %294
    %297 = vst.msk [vmem:[#allocation3] sm:$0xff] %vm57, %v295
    %299 = vrot.lane.b32.xlu0 %v292, 32
    %v300 = vpop.permute.xlu0 %299
    %302 = vst.msk [vmem:[#allocation2] sm:$0xff] %vm57, %v300
    %s303 = scalar_lea.vmem [#allocation9], 16
    %304 = vst.msk [vmem:[%s303] sm:$0xff] %vm57, %v300
    %s305 = scalar_lea.vmem [#allocation4], 24
    %v306 = vld [vmem:[%s305] sm:$0xff]
    %v307 = vld [vmem:[#allocation2] sm:$0xff]
    %v308 = vld [vmem:[#allocation7] sm:$0xff]
    %v309 = vld [vmem:[#allocation7 + $0x8] sm:$0xff]
    %v310 = vld [vmem:[#allocation7 + $0x10] sm:$0xff]
    %v311 = vld [vmem:[#allocation7 + $0x18] sm:$0xff]
    %v313 = vsel %vm57, %v307, 0
    %315 = vmatpush.msra.mxu0 0.0
    %316 = vmatpush.msra.mxu0 0.0
    %317 = vmatpush.msra.mxu0 0.0
    %318 = vmatpush.msra.mxu0 0.0
    %319 = vmatpush.msra.mxu0 0.0
    %320 = vmatpush.msra.mxu0 0.0
    %321 = vmatpush.msra.mxu0 0.0
    %322 = vmatpush.msra.mxu0 0.0
    %323 = vmatpush.msra.mxu0 0.0
    %324 = vmatpush.msra.mxu0 0.0
    %325 = vmatpush.msra.mxu0 0.0
    %326 = vmatpush.msra.mxu0 0.0
    %327 = vmatpush.msra.mxu0 %v311
    %328 = vmatpush.msra.mxu0 %v310
    %329 = vmatpush.msra.mxu0 %v309
    %330 = vmatpush.msra.mxu0 %v308
    %331 = vmatmul.f32.gmra.mxu0 %v313
    %v332 = vpop.f32.mrf.mxu0
    %v333 = vadd.f32 0.0, %v332
    %334 = vdwg.mxu0
    %v335 = vadd.f32 %v306, %v333
    %v336 = vxor.u32 %v335, 2147483648
    %v337 = vmul.f32 %v336, 1.442695
    %v338 = vpow.pop %v337
    %v339 = vadd.f32 %v338, 1.0
    %v340 = vrcp.pop %v339
    %v341 = vmul.f32 %v339, %v340
    %v342 = vsub.f32 1.0, %v341
    %v343 = vmul.f32 %v340, %v342
    %v344 = vadd.f32 %v340, %v343
    %vm345 = vweird.f32 %v339
    %vm346 = vweird.f32 %v340
    %vm347 = vmor %vm345, %vm346
    %v348 = vsel %vm347, %v340, %v344
    %v349 = vand.u32 2147483647, %v339
    %vm350 = vcmp.eq.f32.partialorder %v349, 8.507059e+37
    %v351 = vand.u32 %v339, 2147483648
    %v352 = vor.u32 1.1754944e-38, %v351
    %v353 = vsel %vm350, %v352, %v348
    %v354 = vmul.f32 1.0, %v353
    %v355 = vtanh.pop %v335
    %v356 = vld [vmem:[#allocation3] sm:$0xff]
    %358 = vrot.lane.b32.xlu0 %v356, 32
    %v359 = vpop.permute.xlu0 %358
    %v361 = vmul.f32 %v354, %v359
    %363 = vrot.lane.b32.xlu0 %v355, 64
    %v364 = vpop.permute.xlu0 %363
    %v366 = vmul.f32 %v354, %v364
    %368 = vrot.lane.b32.xlu0 %v366, 32
    %v369 = vpop.permute.xlu0 %368
    %v371 = vadd.f32 %v361, %v369
    %v372 = vtanh.pop %v371
    %374 = vrot.lane.b32.xlu0 %v372, 64
    %v375 = vpop.permute.xlu0 %374
    %v377 = vmul.f32 %v354, %v375
    %379 = vrot.lane.b32.xlu0 %v371, 96
    %v380 = vpop.permute.xlu0 %379
    %382 = vst.msk [vmem:[#allocation3] sm:$0xff] %vm57, %v380
    %384 = vrot.lane.b32.xlu0 %v377, 32
    %v385 = vpop.permute.xlu0 %384
    %387 = vst.msk [vmem:[#allocation2] sm:$0xff] %vm57, %v385
    %s388 = scalar_lea.vmem [#allocation9], 24
    %389 = vst.msk [vmem:[%s388] sm:$0xff] %vm57, %v385
    %s390 = scalar_lea.vmem [#allocation4], 32
    %v391 = vld [vmem:[%s390] sm:$0xff]
    %v392 = vld [vmem:[#allocation2] sm:$0xff]
    %v393 = vld [vmem:[#allocation7] sm:$0xff]
    %v394 = vld [vmem:[#allocation7 + $0x8] sm:$0xff]
    %v395 = vld [vmem:[#allocation7 + $0x10] sm:$0xff]
    %v396 = vld [vmem:[#allocation7 + $0x18] sm:$0xff]
    %v398 = vsel %vm57, %v392, 0
    %400 = vmatpush.msra.mxu0 0.0
    %401 = vmatpush.msra.mxu0 0.0
    %402 = vmatpush.msra.mxu0 0.0
    %403 = vmatpush.msra.mxu0 0.0
    %404 = vmatpush.msra.mxu0 0.0
    %405 = vmatpush.msra.mxu0 0.0
    %406 = vmatpush.msra.mxu0 0.0
    %407 = vmatpush.msra.mxu0 0.0
    %408 = vmatpush.msra.mxu0 0.0
    %409 = vmatpush.msra.mxu0 0.0
    %410 = vmatpush.msra.mxu0 0.0
    %411 = vmatpush.msra.mxu0 0.0
    %412 = vmatpush.msra.mxu0 %v396
    %413 = vmatpush.msra.mxu0 %v395
    %414 = vmatpush.msra.mxu0 %v394
    %415 = vmatpush.msra.mxu0 %v393
    %416 = vmatmul.f32.gmra.mxu0 %v398
    %v417 = vpop.f32.mrf.mxu0
    %v418 = vadd.f32 0.0, %v417
    %419 = vdwg.mxu0
    %v420 = vadd.f32 %v391, %v418
    %v421 = vxor.u32 %v420, 2147483648
    %v422 = vmul.f32 %v421, 1.442695
    %v423 = vpow.pop %v422
    %v424 = vadd.f32 %v423, 1.0
    %v425 = vrcp.pop %v424
    %v426 = vmul.f32 %v424, %v425
    %v427 = vsub.f32 1.0, %v426
    %v428 = vmul.f32 %v425, %v427
    %v429 = vadd.f32 %v425, %v428
    %vm430 = vweird.f32 %v424
    %vm431 = vweird.f32 %v425
    %vm432 = vmor %vm430, %vm431
    %v433 = vsel %vm432, %v425, %v429
    %v434 = vand.u32 2147483647, %v424
    %vm435 = vcmp.eq.f32.partialorder %v434, 8.507059e+37
    %v436 = vand.u32 %v424, 2147483648
    %v437 = vor.u32 1.1754944e-38, %v436
    %v438 = vsel %vm435, %v437, %v433
    %v439 = vmul.f32 1.0, %v438
    %v440 = vtanh.pop %v420
    %v441 = vld [vmem:[#allocation3] sm:$0xff]
    %443 = vrot.lane.b32.xlu0 %v441, 32
    %v444 = vpop.permute.xlu0 %443
    %v446 = vmul.f32 %v439, %v444
    %448 = vrot.lane.b32.xlu0 %v440, 64
    %v449 = vpop.permute.xlu0 %448
    %v451 = vmul.f32 %v439, %v449
    %453 = vrot.lane.b32.xlu0 %v451, 32
    %v454 = vpop.permute.xlu0 %453
    %v456 = vadd.f32 %v446, %v454
    %v457 = vtanh.pop %v456
    %459 = vrot.lane.b32.xlu0 %v457, 64
    %v460 = vpop.permute.xlu0 %459
    %v462 = vmul.f32 %v439, %v460
    %464 = vrot.lane.b32.xlu0 %v456, 96
    %v465 = vpop.permute.xlu0 %464
    %467 = vst.msk [vmem:[#allocation3] sm:$0xff] %vm57, %v465
    %469 = vrot.lane.b32.xlu0 %v462, 32
    %v470 = vpop.permute.xlu0 %469
    %472 = vst.msk [vmem:[#allocation2] sm:$0xff] %vm57, %v470
    %s473 = scalar_lea.vmem [#allocation9], 32
    %474 = vst.msk [vmem:[%s473] sm:$0xff] %vm57, %v470
    %s475 = scalar_lea.vmem [#allocation4], 40
    %v476 = vld [vmem:[%s475] sm:$0xff]
    %v477 = vld [vmem:[#allocation2] sm:$0xff]
    %v478 = vld [vmem:[#allocation7] sm:$0xff]
    %v479 = vld [vmem:[#allocation7 + $0x8] sm:$0xff]
    %v480 = vld [vmem:[#allocation7 + $0x10] sm:$0xff]
    %v481 = vld [vmem:[#allocation7 + $0x18] sm:$0xff]
    %v483 = vsel %vm57, %v477, 0
    %485 = vmatpush.msra.mxu0 0.0
    %486 = vmatpush.msra.mxu0 0.0
    %487 = vmatpush.msra.mxu0 0.0
    %488 = vmatpush.msra.mxu0 0.0
    %489 = vmatpush.msra.mxu0 0.0
    %490 = vmatpush.msra.mxu0 0.0
    %491 = vmatpush.msra.mxu0 0.0
    %492 = vmatpush.msra.mxu0 0.0
    %493 = vmatpush.msra.mxu0 0.0
    %494 = vmatpush.msra.mxu0 0.0
    %495 = vmatpush.msra.mxu0 0.0
    %496 = vmatpush.msra.mxu0 0.0
    %497 = vmatpush.msra.mxu0 %v481
    %498 = vmatpush.msra.mxu0 %v480
    %499 = vmatpush.msra.mxu0 %v479
    %500 = vmatpush.msra.mxu0 %v478
    %501 = vmatmul.f32.gmra.mxu0 %v483
    %v502 = vpop.f32.mrf.mxu0
    %v503 = vadd.f32 0.0, %v502
    %504 = vdwg.mxu0
    %v505 = vadd.f32 %v476, %v503
    %v506 = vxor.u32 %v505, 2147483648
    %v507 = vmul.f32 %v506, 1.442695
    %v508 = vpow.pop %v507
    %v509 = vadd.f32 %v508, 1.0
    %v510 = vrcp.pop %v509
    %v511 = vmul.f32 %v509, %v510
    %v512 = vsub.f32 1.0, %v511
    %v513 = vmul.f32 %v510, %v512
    %v514 = vadd.f32 %v510, %v513
    %vm515 = vweird.f32 %v509
    %vm516 = vweird.f32 %v510
    %vm517 = vmor %vm515, %vm516
    %v518 = vsel %vm517, %v510, %v514
    %v519 = vand.u32 2147483647, %v509
    %vm520 = vcmp.eq.f32.partialorder %v519, 8.507059e+37
    %v521 = vand.u32 %v509, 2147483648
    %v522 = vor.u32 1.1754944e-38, %v521
    %v523 = vsel %vm520, %v522, %v518
    %v524 = vmul.f32 1.0, %v523
    %v525 = vtanh.pop %v505
    %v526 = vld [vmem:[#allocation3] sm:$0xff]
    %528 = vrot.lane.b32.xlu0 %v526, 32
    %v529 = vpop.permute.xlu0 %528
    %v531 = vmul.f32 %v524, %v529
    %533 = vrot.lane.b32.xlu0 %v525, 64
    %v534 = vpop.permute.xlu0 %533
    %v536 = vmul.f32 %v524, %v534
    %538 = vrot.lane.b32.xlu0 %v536, 32
    %v539 = vpop.permute.xlu0 %538
    %v541 = vadd.f32 %v531, %v539
    %v542 = vtanh.pop %v541
    %544 = vrot.lane.b32.xlu0 %v542, 64
    %v545 = vpop.permute.xlu0 %544
    %v547 = vmul.f32 %v524, %v545
    %549 = vrot.lane.b32.xlu0 %v541, 96
    %v550 = vpop.permute.xlu0 %549
    %552 = vst.msk [vmem:[#allocation3] sm:$0xff] %vm57, %v550
    %554 = vrot.lane.b32.xlu0 %v547, 32
    %v555 = vpop.permute.xlu0 %554
    %557 = vst.msk [vmem:[#allocation2] sm:$0xff] %vm57, %v555
    %s558 = scalar_lea.vmem [#allocation9], 40
    %559 = vst.msk [vmem:[%s558] sm:$0xff] %vm57, %v555
    %s560 = scalar_lea.vmem [#allocation4], 48
    %v561 = vld [vmem:[%s560] sm:$0xff]
    %v562 = vld [vmem:[#allocation2] sm:$0xff]
    %v563 = vld [vmem:[#allocation7] sm:$0xff]
    %v564 = vld [vmem:[#allocation7 + $0x8] sm:$0xff]
    %v565 = vld [vmem:[#allocation7 + $0x10] sm:$0xff]
    %v566 = vld [vmem:[#allocation7 + $0x18] sm:$0xff]
    %v568 = vsel %vm57, %v562, 0
    %570 = vmatpush.msra.mxu0 0.0
    %571 = vmatpush.msra.mxu0 0.0
    %572 = vmatpush.msra.mxu0 0.0
    %573 = vmatpush.msra.mxu0 0.0
    %574 = vmatpush.msra.mxu0 0.0
    %575 = vmatpush.msra.mxu0 0.0
    %576 = vmatpush.msra.mxu0 0.0
    %577 = vmatpush.msra.mxu0 0.0
    %578 = vmatpush.msra.mxu0 0.0
    %579 = vmatpush.msra.mxu0 0.0
    %580 = vmatpush.msra.mxu0 0.0
    %581 = vmatpush.msra.mxu0 0.0
    %582 = vmatpush.msra.mxu0 %v566
    %583 = vmatpush.msra.mxu0 %v565
    %584 = vmatpush.msra.mxu0 %v564
    %585 = vmatpush.msra.mxu0 %v563
    %586 = vmatmul.f32.gmra.mxu0 %v568
    %v587 = vpop.f32.mrf.mxu0
    %v588 = vadd.f32 0.0, %v587
    %589 = vdwg.mxu0
    %v590 = vadd.f32 %v561, %v588
    %v591 = vxor.u32 %v590, 2147483648
    %v592 = vmul.f32 %v591, 1.442695
    %v593 = vpow.pop %v592
    %v594 = vadd.f32 %v593, 1.0
    %v595 = vrcp.pop %v594
    %v596 = vmul.f32 %v594, %v595
    %v597 = vsub.f32 1.0, %v596
    %v598 = vmul.f32 %v595, %v597
    %v599 = vadd.f32 %v595, %v598
    %vm600 = vweird.f32 %v594
    %vm601 = vweird.f32 %v595
    %vm602 = vmor %vm600, %vm601
    %v603 = vsel %vm602, %v595, %v599
    %v604 = vand.u32 2147483647, %v594
    %vm605 = vcmp.eq.f32.partialorder %v604, 8.507059e+37
    %v606 = vand.u32 %v594, 2147483648
    %v607 = vor.u32 1.1754944e-38, %v606
    %v608 = vsel %vm605, %v607, %v603
    %v609 = vmul.f32 1.0, %v608
    %v610 = vtanh.pop %v590
    %v611 = vld [vmem:[#allocation3] sm:$0xff]
    %613 = vrot.lane.b32.xlu0 %v611, 32
    %v614 = vpop.permute.xlu0 %613
    %v616 = vmul.f32 %v609, %v614
    %618 = vrot.lane.b32.xlu0 %v610, 64
    %v619 = vpop.permute.xlu0 %618
    %v621 = vmul.f32 %v609, %v619
    %623 = vrot.lane.b32.xlu0 %v621, 32
    %v624 = vpop.permute.xlu0 %623
    %v626 = vadd.f32 %v616, %v624
    %v627 = vtanh.pop %v626
    %629 = vrot.lane.b32.xlu0 %v627, 64
    %v630 = vpop.permute.xlu0 %629
    %v632 = vmul.f32 %v609, %v630
    %634 = vrot.lane.b32.xlu0 %v626, 96
    %v635 = vpop.permute.xlu0 %634
    %637 = vst.msk [vmem:[#allocation3] sm:$0xff] %vm57, %v635
    %639 = vrot.lane.b32.xlu0 %v632, 32
    %v640 = vpop.permute.xlu0 %639
    %642 = vst.msk [vmem:[#allocation2] sm:$0xff] %vm57, %v640
    %s643 = scalar_lea.vmem [#allocation9], 48
    %644 = vst.msk [vmem:[%s643] sm:$0xff] %vm57, %v640
    %s645 = scalar_lea.vmem [#allocation4], 56
    %v646 = vld [vmem:[%s645] sm:$0xff]
    %v647 = vld [vmem:[#allocation2] sm:$0xff]
    %v648 = vld [vmem:[#allocation7] sm:$0xff]
    %v649 = vld [vmem:[#allocation7 + $0x8] sm:$0xff]
    %v650 = vld [vmem:[#allocation7 + $0x10] sm:$0xff]
    %v651 = vld [vmem:[#allocation7 + $0x18] sm:$0xff]
    %v653 = vsel %vm57, %v647, 0
    %655 = vmatpush.msra.mxu0 0.0
    %656 = vmatpush.msra.mxu0 0.0
    %657 = vmatpush.msra.mxu0 0.0
    %658 = vmatpush.msra.mxu0 0.0
    %659 = vmatpush.msra.mxu0 0.0
    %660 = vmatpush.msra.mxu0 0.0
    %661 = vmatpush.msra.mxu0 0.0
    %662 = vmatpush.msra.mxu0 0.0
    %663 = vmatpush.msra.mxu0 0.0
    %664 = vmatpush.msra.mxu0 0.0
    %665 = vmatpush.msra.mxu0 0.0
    %666 = vmatpush.msra.mxu0 0.0
    %667 = vmatpush.msra.mxu0 %v651
    %668 = vmatpush.msra.mxu0 %v650
    %669 = vmatpush.msra.mxu0 %v649
    %670 = vmatpush.msra.mxu0 %v648
    %671 = vmatmul.f32.gmra.mxu0 %v653
    %v672 = vpop.f32.mrf.mxu0
    %v673 = vadd.f32 0.0, %v672
    %674 = vdwg.mxu0
    %v675 = vadd.f32 %v646, %v673
    %v676 = vxor.u32 %v675, 2147483648
    %v677 = vmul.f32 %v676, 1.442695
    %v678 = vpow.pop %v677
    %v679 = vadd.f32 %v678, 1.0
    %v680 = vrcp.pop %v679
    %v681 = vmul.f32 %v679, %v680
    %v682 = vsub.f32 1.0, %v681
    %v683 = vmul.f32 %v680, %v682
    %v684 = vadd.f32 %v680, %v683
    %vm685 = vweird.f32 %v679
    %vm686 = vweird.f32 %v680
    %vm687 = vmor %vm685, %vm686
    %v688 = vsel %vm687, %v680, %v684
    %v689 = vand.u32 2147483647, %v679
    %vm690 = vcmp.eq.f32.partialorder %v689, 8.507059e+37
    %v691 = vand.u32 %v679, 2147483648
    %v692 = vor.u32 1.1754944e-38, %v691
    %v693 = vsel %vm690, %v692, %v688
    %v694 = vmul.f32 1.0, %v693
    %v695 = vtanh.pop %v675
    %v696 = vld [vmem:[#allocation3] sm:$0xff]
    %698 = vrot.lane.b32.xlu0 %v696, 32
    %v699 = vpop.permute.xlu0 %698
    %v701 = vmul.f32 %v694, %v699
    %703 = vrot.lane.b32.xlu0 %v695, 64
    %v704 = vpop.permute.xlu0 %703
    %v706 = vmul.f32 %v694, %v704
    %708 = vrot.lane.b32.xlu0 %v706, 32
    %v709 = vpop.permute.xlu0 %708
    %v711 = vadd.f32 %v701, %v709
    %v712 = vtanh.pop %v711
    %714 = vrot.lane.b32.xlu0 %v712, 64
    %v715 = vpop.permute.xlu0 %714
    %v717 = vmul.f32 %v694, %v715
    %719 = vrot.lane.b32.xlu0 %v711, 96
    %v720 = vpop.permute.xlu0 %719
    %722 = vst.msk [vmem:[#allocation3] sm:$0xff] %vm57, %v720
    %724 = vrot.lane.b32.xlu0 %v717, 32
    %v725 = vpop.permute.xlu0 %724
    %727 = vst.msk [vmem:[#allocation2] sm:$0xff] %vm57, %v725
    %s728 = scalar_lea.vmem [#allocation9], 56
    %729 = vst.msk [vmem:[%s728] sm:$0xff] %vm57, %v725
    // Predicated region
    $region22: #{tpu_custom_call.1} parent=1 // pred_check
      _
    $region23: #{tpu_custom_call.1} parent=1 // pred_check_branch
      %731 = sbr.rel (0) target = $region25
    $region24: #{tpu_custom_call.1} parent=1 // pred_region
      %733 = vsyncadd [#allocation6], 0
      %s734 = sshll.u32 [#allocation9], 4
      %s735 = int_to_ptr.vmem [resolvable:$true] %s734
      %s736 = sshll.u32 %s2, 4
      %s737 = int_to_ptr.hbm [resolvable:$true] %s736
      %742 = dma.vmem_to_hbm [thread:$0]  %s735, 1024, %s737, [#allocation6], 128, 128, 8
    $region25: #{tpu_custom_call.1} parent=1 // pred_fallthru
      _
    // Predicated region
    $region26: #{tpu_custom_call.1} parent=1 // pred_check
      _
    $region27: #{tpu_custom_call.1} parent=1 // pred_check_branch
      %744 = sbr.rel (0) target = $region29
    $region28: #{tpu_custom_call.1} parent=1 // pred_region
      %746 = dma.done [#allocation6], 1024
    $region29: #{tpu_custom_call.1} parent=1 // pred_fallthru
      _
    %747 = vsyncpa [#allocation5], 1
    %748 = vsyncpa [#allocation8], 1
    %749 = vsyncpa [#allocation6], 1

</llo_original>
